<compile_context>
chip_gen: v5e
topology: v5e:2x2
jax: 0.10.0
libtpu: 0.0.40
codegen_flags: <defaults>
</compile_context>

<pallas_src>
import functools
import numpy as np
import jax
import jax.numpy as jnp
from jax import lax
from jax.experimental import pallas as pl
from jax.experimental.pallas import tpu as pltpu


# ----------------------------------------------------------------------------
# Faithful numpy port of get_kernel (torch-free, deterministic).
# ----------------------------------------------------------------------------
def get_kernel(factor, kernel_type, phase, kernel_width, support=None, sigma=None):
    assert kernel_type in ['lanczos', 'gauss', 'box']
    if phase == 0.5 and kernel_type != 'box':
        kernel = np.zeros([kernel_width - 1, kernel_width - 1])
    else:
        kernel = np.zeros([kernel_width, kernel_width])
    if kernel_type == 'box':
        assert phase == 0.5, 'Box filter is always half-phased'
        kernel[:] = 1.0 / (kernel_width * kernel_width)
    elif kernel_type == 'gauss':
        assert sigma, 'sigma is not specified'
        assert phase != 0.5, 'phase 1/2 for gauss not implemented'
        center = (kernel_width + 1.0) / 2.0
        sigma_sq = sigma * sigma
        for i in range(1, kernel.shape[0] + 1):
            for j in range(1, kernel.shape[1] + 1):
                di = (i - center) / 2.0
                dj = (j - center) / 2.0
                kernel[i - 1][j - 1] = np.exp(-(di * di + dj * dj) / (2 * sigma_sq))
                kernel[i - 1][j - 1] = kernel[i - 1][j - 1] / (2.0 * np.pi * sigma_sq)
    elif kernel_type == 'lanczos':
        assert support, 'support is not specified'
        center = (kernel_width + 1) / 2.0
        for i in range(1, kernel.shape[0] + 1):
            for j in range(1, kernel.shape[1] + 1):
                if phase == 0.5:
                    di = abs(i + 0.5 - center) / factor
                    dj = abs(j + 0.5 - center) / factor
                else:
                    di = abs(i - center) / factor
                    dj = abs(j - center) / factor
                val = 1
                if di != 0:
                    val = val * support * np.sin(np.pi * di) * np.sin(np.pi * di / support)
                    val = val / (np.pi * np.pi * di * di)
                if dj != 0:
                    val = val * support * np.sin(np.pi * dj) * np.sin(np.pi * dj / support)
                    val = val / (np.pi * np.pi * dj * dj)
                kernel[i - 1][j - 1] = val
    else:
        assert False, 'wrong method name'
    kernel /= kernel.sum()
    return kernel


# ----------------------------------------------------------------------------
# Separable factorization + strided band matrices (host-side, tiny constants).
# ----------------------------------------------------------------------------
def _separable_factors(kernel_np):
    """kernel2d == outer(kh_1d, kw_1d) exactly for lanczos/gauss/box from get_kernel."""
    k2 = np.asarray(kernel_np, np.float64)
    kh = k2.sum(axis=1)     # since k2.sum() == 1, outer(rowsum, colsum) == k2
    kw = k2.sum(axis=0)
    err = np.abs(np.outer(kh, kw) - k2).max()
    # TODO(synk): add a dense (non-separable) fallback path; not needed for any
    # kernel_type this module can construct.
    assert err <= 1e-6 * max(np.abs(k2).max(), 1e-30), \
        f"2-D kernel is not separable (max err {err}); dense path not implemented"
    return kh.astype(np.float32), kw.astype(np.float32)


def _band_matrix(k1d, in_len, out_len, f):
    """M[in, out] with M[o*f + t, o] = k1d[t]  ->  (x @ M)[., o] = strided 1-D conv."""
    K = int(k1d.shape[0])
    m = np.zeros((in_len, out_len), np.float32)
    for o in range(out_len):
        m[o * f:o * f + K, o] = k1d
    return m


# ----------------------------------------------------------------------------
# Pallas kernel: separable strided depthwise conv for a block of B images.
#   x_ref : (B*Hp8, Wp)  row-flattened images (image b = rows [b*Hp8, (b+1)*Hp8))
#   bw_ref: (Wp, OW)     W-direction strided band matrix (1-D taps)
#   ah_ref: (OH, Hp8)    H-direction strided band matrix (1-D taps)
#   o_ref : (B*OH, OW)
# Both passes run on the MXU; no per-tap VALU loop and no lane-shifted slices.
# ----------------------------------------------------------------------------
def _downsample_kernel(x_ref, bw_ref, ah_ref, o_ref, *, B, Hp8, OH):
    x = x_ref[...].astype(jnp.float32)
    bw = bw_ref[...]
    ah = ah_ref[...]
    # Pass 1 (W direction): one matmul over all B*Hp8 rows at once.
    t = jnp.dot(x, bw, preferred_element_type=jnp.float32)            # (B*Hp8, OW)
    # Pass 2 (H direction): per-image small matmul; the row slices are
    # sublane-aligned because Hp8 % 8 == 0.
    for b in range(B):
        tb = t[b * Hp8:(b + 1) * Hp8, :]                               # (Hp8, OW)
        yb = jnp.dot(ah, tb, preferred_element_type=jnp.float32)       # (OH, OW)
        o_ref[b * OH:(b + 1) * OH, :] = yb.astype(o_ref.dtype)


# ----------------------------------------------------------------------------
# Block-channel chooser: amortize per-step overhead, keep >=2 parallel grid
# steps (v7x megacore), keep blocks small enough for every chip's VMEM.
# ----------------------------------------------------------------------------
def _choose_block_channels(nc, oh, hp8, wp, itemsize,
                           max_b=32, block_cap_bytes=2 * 1024 * 1024):
    divs = [d for d in range(1, min(nc, max_b) + 1) if nc % d == 0]
    valid = [d for d in divs
             if (d * oh) % 8 == 0                       # output block row alignment
             and d * hp8 * wp * itemsize <= block_cap_bytes]
    multi = [d for d in valid if nc // d >= 2]          # keep both TCs busy on v7x
    if multi:
        return max(multi)
    if valid:
        return max(valid)
    # Fallback: one grid step with full-extent blocks (always layout-legal).
    # TODO(synk): add an output-row tiling grid axis (with a (K-1)//f row halo)
    # for very large images so per-step blocks stay inside v7x's 64 MiB VMEM.
    return nc


# ----------------------------------------------------------------------------
# Wrapper: replication pad (+8-row alignment pad folded into the same edge pad),
# free row-major reshapes, then pallas_call.  No transposes.
# ----------------------------------------------------------------------------
def downsampler_forward(x, kernel_np, factor, preserve_size=False):
    # x: (N, C, H, W), NCHW like PyTorch.
    N, C, H, W = x.shape
    K = int(np.asarray(kernel_np).shape[0])
    f = int(factor)

    pad = (K - 1) // 2 if K % 2 == 1 else (K - f) // 2
    ph = pad if preserve_size else 0
    pw = pad if preserve_size else 0

    Hp = H + 2 * ph
    Wp = W + 2 * pw
    OH = (Hp - K) // f + 1
    OW = (Wp - K) // f + 1
    assert OH >= 1 and OW >= 1, "input too small for this kernel/factor"

    # Pad H up to a multiple of 8 (sublane alignment for the row-flattened
    # layout).  Extra rows use edge replication; they are never referenced by
    # the H-pass band matrix, so values are irrelevant.
    Hp8 = -(-Hp // 8) * 8
    extra_h = Hp8 - Hp
    if ph or pw or extra_h:
        x = jnp.pad(x, ((0, 0), (0, 0), (ph, ph + extra_h), (pw, pw)), mode='edge')

    NC = N * C
    x2 = x.reshape(NC * Hp8, Wp)                     # free row-major reshape

    kh1d, kw1d = _separable_factors(kernel_np)
    bw = jnp.asarray(_band_matrix(kw1d, Wp, OW, f))          # (Wp, OW)
    ah = jnp.asarray(_band_matrix(kh1d, Hp8, OH, f).T)       # (OH, Hp8)

    B = _choose_block_channels(NC, OH, Hp8, Wp, x.dtype.itemsize)
    grid = (NC // B,)

    kern = functools.partial(_downsample_kernel, B=B, Hp8=Hp8, OH=OH)

    out = pl.pallas_call(
        kern,
        out_shape=jax.ShapeDtypeStruct((NC * OH, OW), x.dtype),
        grid=grid,
        in_specs=[
            pl.BlockSpec((B * Hp8, Wp), lambda i: (i, 0)),   # B images per step
            pl.BlockSpec((Wp, OW), lambda i: (0, 0)),        # shared W band matrix
            pl.BlockSpec((OH, Hp8), lambda i: (0, 0)),       # shared H band matrix
        ],
        out_specs=pl.BlockSpec((B * OH, OW), lambda i: (i, 0)),
        compiler_params=pltpu.CompilerParams(
            dimension_semantics=("parallel",),
            vmem_limit_bytes=32 * 1024 * 1024),
    )(x2, bw, ah)

    return out.reshape(N, C, OH, OW)


# ----------------------------------------------------------------------------
# Pure-JAX reference (dense depthwise conv with the 2-D kernel) for validation.
# ----------------------------------------------------------------------------
def downsampler_reference(x, kernel_np, factor, preserve_size=False):
    N, C, H, W = x.shape
    K = int(np.asarray(kernel_np).shape[0])
    f = int(factor)
    if preserve_size:
        pad = (K - 1) // 2 if K % 2 == 1 else (K - f) // 2
        x = jnp.pad(x, ((0, 0), (0, 0), (pad, pad), (pad, pad)), mode='edge')
    w = jnp.broadcast_to(jnp.asarray(kernel_np, jnp.float32)[None, None], (C, 1, K, K))
    return lax.conv_general_dilated(
        x, w, window_strides=(f, f), padding='VALID',
        dimension_numbers=('NCHW', 'OIHW', 'NCHW'), feature_group_count=C)


if __name__ == "__main__":
    # Config mirroring Downsampler(n_planes=4, factor=2, kernel_type='lanczos2',
    #                              phase=0, preserve_size=True)
    n_planes, factor = 4, 2
    kernel_np = get_kernel(factor, 'lanczos', phase=0,
                           kernel_width=4 * factor + 1, support=2)  # 'lanczos2' -> 9x9

    N, C, H, W = 2, n_planes, 16, 16
    x = jax.random.normal(jax.random.PRNGKey(0), (N, C, H, W), dtype=jnp.float32)

    y = downsampler_forward(x, kernel_np, factor, preserve_size=True)
    y = jax.block_until_ready(y)

    y_ref = downsampler_reference(x, kernel_np, factor, preserve_size=True)
    y_ref = jax.block_until_ready(y_ref)

    assert y.shape == (N, C, H // factor, W // factor), y.shape
    assert np.allclose(np.asarray(y), np.asarray(y_ref), atol=1e-4, rtol=1e-4), \
        "mismatch vs reference conv"

    print("KERNEL_OK")
</pallas_src>

<mosaic_0001>
module attributes {stable_mosaic.version = 11 : i64} {
  func.func @_downsample_kernel(%arg0: i32, %arg1: memref<96x24xf32, #tpu.memory_space<vmem>>, %arg2: memref<24x8xf32, #tpu.memory_space<vmem>>, %arg3: memref<8x24xf32, #tpu.memory_space<vmem>>, %arg4: memref<32x8xf32, #tpu.memory_space<vmem>>) attributes {dimension_semantics = [#tpu.dimension_semantics<parallel>], iteration_bounds = array<i64: 2>, scalar_prefetch = 0 : i64, scratch_operands = 0 : i64, tpu.core_type = #tpu.core_type<tc>, window_params = [{transform_indices = @transform_0, window_bounds = array<i64: 96, 24>}, {pipeline_mode = #tpu.pipeline_mode<synchronous>, transform_indices = @transform_1, window_bounds = array<i64: 24, 8>}, {pipeline_mode = #tpu.pipeline_mode<synchronous>, transform_indices = @transform_2, window_bounds = array<i64: 8, 24>}, {transform_indices = @transform_3, window_bounds = array<i64: 32, 8>}]} {
    %c0 = arith.constant 0 : index
    %c0_0 = arith.constant 0 : index
    %0 = vector.load %arg1[%c0, %c0_0] : memref<96x24xf32, #tpu.memory_space<vmem>>, vector<96x24xf32>
    %c0_1 = arith.constant 0 : index
    %c0_2 = arith.constant 0 : index
    %1 = vector.load %arg2[%c0_1, %c0_2] : memref<24x8xf32, #tpu.memory_space<vmem>>, vector<24x8xf32>
    %c0_3 = arith.constant 0 : index
    %c0_4 = arith.constant 0 : index
    %2 = vector.load %arg3[%c0_3, %c0_4] : memref<8x24xf32, #tpu.memory_space<vmem>>, vector<8x24xf32>
    %cst = arith.constant dense<0.000000e+00> : vector<96x8xf32>
    %3 = tpu.matmul %0, %1, %cst {dimension_numbers = #tpu.dot_dimension_numbers<[1], [0], [0], [1], [0, 0, 1, 1], [], []>} : vector<96x24xf32>, vector<24x8xf32>, vector<96x8xf32> -> vector<96x8xf32>
    %4 = vector.extract_strided_slice %3 {offsets = [0, 0], sizes = [24, 8], strides = [1, 1]} : vector<96x8xf32> to vector<24x8xf32>
    %cst_5 = arith.constant dense<0.000000e+00> : vector<8x8xf32>
    %5 = tpu.matmul %2, %4, %cst_5 {dimension_numbers = #tpu.dot_dimension_numbers<[1], [0], [0], [1], [0, 0, 1, 1], [], []>} : vector<8x24xf32>, vector<24x8xf32>, vector<8x8xf32> -> vector<8x8xf32>
    %c0_6 = arith.constant 0 : index
    %c0_7 = arith.constant 0 : index
    %6 = vector.load %arg4[%c0_6, %c0_7] : memref<32x8xf32, #tpu.memory_space<vmem>>, vector<8x8xf32>
    tpu.vector_store %arg4[%c0_6, %c0_7], %5 {strides = array<i32>} : memref<32x8xf32, #tpu.memory_space<vmem>>, vector<8x8xf32>,
    %7 = vector.extract_strided_slice %3 {offsets = [24, 0], sizes = [24, 8], strides = [1, 1]} : vector<96x8xf32> to vector<24x8xf32>
    %cst_8 = arith.constant dense<0.000000e+00> : vector<8x8xf32>
    %8 = tpu.matmul %2, %7, %cst_8 {dimension_numbers = #tpu.dot_dimension_numbers<[1], [0], [0], [1], [0, 0, 1, 1], [], []>} : vector<8x24xf32>, vector<24x8xf32>, vector<8x8xf32> -> vector<8x8xf32>
    %c8 = arith.constant 8 : index
    %c0_9 = arith.constant 0 : index
    %9 = vector.load %arg4[%c8, %c0_9] : memref<32x8xf32, #tpu.memory_space<vmem>>, vector<8x8xf32>
    tpu.vector_store %arg4[%c8, %c0_9], %8 {strides = array<i32>} : memref<32x8xf32, #tpu.memory_space<vmem>>, vector<8x8xf32>,
    %10 = vector.extract_strided_slice %3 {offsets = [48, 0], sizes = [24, 8], strides = [1, 1]} : vector<96x8xf32> to vector<24x8xf32>
    %cst_10 = arith.constant dense<0.000000e+00> : vector<8x8xf32>
    %11 = tpu.matmul %2, %10, %cst_10 {dimension_numbers = #tpu.dot_dimension_numbers<[1], [0], [0], [1], [0, 0, 1, 1], [], []>} : vector<8x24xf32>, vector<24x8xf32>, vector<8x8xf32> -> vector<8x8xf32>
    %c16 = arith.constant 16 : index
    %c0_11 = arith.constant 0 : index
    %12 = vector.load %arg4[%c16, %c0_11] : memref<32x8xf32, #tpu.memory_space<vmem>>, vector<8x8xf32>
    tpu.vector_store %arg4[%c16, %c0_11], %11 {strides = array<i32>} : memref<32x8xf32, #tpu.memory_space<vmem>>, vector<8x8xf32>,
    %13 = vector.extract_strided_slice %3 {offsets = [72, 0], sizes = [24, 8], strides = [1, 1]} : vector<96x8xf32> to vector<24x8xf32>
    %cst_12 = arith.constant dense<0.000000e+00> : vector<8x8xf32>
    %14 = tpu.matmul %2, %13, %cst_12 {dimension_numbers = #tpu.dot_dimension_numbers<[1], [0], [0], [1], [0, 0, 1, 1], [], []>} : vector<8x24xf32>, vector<24x8xf32>, vector<8x8xf32> -> vector<8x8xf32>
    %c24 = arith.constant 24 : index
    %c0_13 = arith.constant 0 : index
    %15 = vector.load %arg4[%c24, %c0_13] : memref<32x8xf32, #tpu.memory_space<vmem>>, vector<8x8xf32>
    tpu.vector_store %arg4[%c24, %c0_13], %14 {strides = array<i32>} : memref<32x8xf32, #tpu.memory_space<vmem>>, vector<8x8xf32>,
    return
  }
  func.func @transform_0(%arg0: i32) -> (i32, i32) {
    %c0_i32 = arith.constant 0 : i32
    %c0_i32_0 = arith.constant 0 : i32
    return %arg0, %c0_i32 : i32, i32
  }
  func.func @transform_1(%arg0: i32) -> (i32, i32) {
    %c0_i32 = arith.constant 0 : i32
    %c0_i32_0 = arith.constant 0 : i32
    %c0_i32_1 = arith.constant 0 : i32
    return %c0_i32, %c0_i32_0 : i32, i32
  }
  func.func @transform_2(%arg0: i32) -> (i32, i32) {
    %c0_i32 = arith.constant 0 : i32
    %c0_i32_0 = arith.constant 0 : i32
    %c0_i32_1 = arith.constant 0 : i32
    return %c0_i32, %c0_i32_0 : i32, i32
  }
  func.func @transform_3(%arg0: i32) -> (i32, i32) {
    %c0_i32 = arith.constant 0 : i32
    %c0_i32_0 = arith.constant 0 : i32
    return %arg0, %c0_i32 : i32, i32
  }
}

</mosaic_0001>

<llo_original>
// kernel: tpu_custom_call.1
$region0: #{tpu_custom_call.1}
  #allocation0 [shape = 'u32[]', space=smem, size = 0x4, offset = 0x4, fixed_abs, tag = 'smem constant byte address 0x4 - core index']
  #allocation1 [shape = 'u32[72,128]{1,0:T(1,128)}', space=vmem, size = 0x9000, scoped, tag = 'internal scratch']
  %s0 = inlined_call_operand.vmem [shape: f32[192,24], index: 0, kind: input, shape index: {}]
  %s1 = inlined_call_operand.vmem [shape: f32[24,8], index: 1, kind: input, shape index: {}]
  %s2 = inlined_call_operand.vmem [shape: f32[8,24], index: 2, kind: input, shape index: {}]
  %s3 = inlined_call_operand.vmem [shape: f32[64,8], index: 3, kind: output, shape index: {}]
  %s4 = sld [smem:[#allocation0]]
  $region45: #{tpu_custom_call.1} parent=0
    _
  %s6 = ssub.s32 1, %s4
  %s7 = scalar_select 0, %s6, %s4
  loop: start=0, step=1, limit=4
  $region2: #{tpu_custom_call.1} parent=0 // loop_pre_header
    _
  $region3: #{tpu_custom_call.1} parent=0 // loop_header
    %s9 = sphi 0, %s13
    %p10 = scmp.ge.s32.totalorder %s9, 4
    %s19 = sphi 0, %s21
    %s22 = sphi 0, %s19
    %s23 = sphi 0, %s22
    %s39 = sphi 0, %s23
    %s43 = sphi 0, %s43
    %s45 = sphi 0, %s43
    %s46 = sphi 0, %s45
    %s60 = sphi 0, %s46
    %s64 = sphi 0, %s64
    %s66 = sphi 0, %s64
    %s67 = sphi 0, %s66
    %s81 = sphi 0, %s67
    %s87 = sphi 0, %s89
    %s90 = sphi 0, %s87
    %s91 = sphi 0, %s90
    %s107 = sphi 0, %s91
  $region4: #{tpu_custom_call.1} parent=0 // loop_header_branch
    %12 = sbr.rel (%p10) target = $region8
  $region5: #{tpu_custom_call.1} parent=0 // loop_body
    %s14 = ssub.s32 %s9, 1
    %s15 = ssub.s32 %s9, 2
    %s16 = sadd.s32 %s9, 1
    %s17 = ssub.s32 %s9, %s16
    %p18 = scmp.eq.s32.totalorder %s17, 0
    %s20 = sadd.s32 %s19, 1
    %s21 = scalar_select %p18, %s19, %s20
    %p24 = pneg %p18
    %p25 = scmp.eq.s32.totalorder %s9, 1
    %p26 = por %p24, %p25
    %p27 = scmp.ne.s32.totalorder %s19, %s22
    %p28 = scmp.eq.s32.totalorder %s9, 0
    %p29 = por %p27, %p28
    %p30 = scmp.ne.s32.totalorder %s19, %s22
    %p31 = scmp.eq.s32.totalorder %s14, 1
    %p32 = por %p30, %p31
    %p33 = scmp.ne.s32.totalorder %s22, %s23
    %p34 = scmp.eq.s32.totalorder %s14, 0
    %p35 = por %p33, %p34
    %p36 = scmp.ne.s32.totalorder %s22, %s23
    %p37 = scmp.eq.s32.totalorder %s15, 1
    %p38 = por %p36, %p37
    %p40 = scmp.ne.s32.totalorder %s23, %s39
    %p41 = scmp.eq.s32.totalorder %s15, 0
    %p42 = por %p40, %p41
    %s44 = sadd.s32 %s43, 1
    %p47 = scmp.eq.s32.totalorder %s9, 1
    %p48 = scmp.ne.s32.totalorder %s43, %s45
    %p49 = scmp.eq.s32.totalorder %s9, 0
    %p50 = por %p48, %p49
    %p51 = scmp.ne.s32.totalorder %s43, %s45
    %p52 = scmp.eq.s32.totalorder %s14, 1
    %p53 = por %p51, %p52
    %p54 = scmp.ne.s32.totalorder %s45, %s46
    %p55 = scmp.eq.s32.totalorder %s14, 0
    %p56 = por %p54, %p55
    %p57 = scmp.ne.s32.totalorder %s45, %s46
    %p58 = scmp.eq.s32.totalorder %s15, 1
    %p59 = por %p57, %p58
    %p61 = scmp.ne.s32.totalorder %s46, %s60
    %p62 = scmp.eq.s32.totalorder %s15, 0
    %p63 = por %p61, %p62
    %s65 = sadd.s32 %s64, 1
    %p68 = scmp.eq.s32.totalorder %s9, 1
    %p69 = scmp.ne.s32.totalorder %s64, %s66
    %p70 = scmp.eq.s32.totalorder %s9, 0
    %p71 = por %p69, %p70
    %p72 = scmp.ne.s32.totalorder %s64, %s66
    %p73 = scmp.eq.s32.totalorder %s14, 1
    %p74 = por %p72, %p73
    %p75 = scmp.ne.s32.totalorder %s66, %s67
    %p76 = scmp.eq.s32.totalorder %s14, 0
    %p77 = por %p75, %p76
    %p78 = scmp.ne.s32.totalorder %s66, %s67
    %p79 = scmp.eq.s32.totalorder %s15, 1
    %p80 = por %p78, %p79
    %p82 = scmp.ne.s32.totalorder %s67, %s81
    %p83 = scmp.eq.s32.totalorder %s15, 0
    %p84 = por %p82, %p83
    %s85 = ssub.s32 %s9, %s16
    %p86 = scmp.eq.s32.totalorder %s85, 0
    %s88 = sadd.s32 %s87, 1
    %s89 = scalar_select %p86, %s87, %s88
    %p92 = pneg %p86
    %p93 = scmp.eq.s32.totalorder %s9, 1
    %p94 = por %p92, %p93
    %p95 = scmp.ne.s32.totalorder %s87, %s90
    %p96 = scmp.eq.s32.totalorder %s9, 0
    %p97 = por %p95, %p96
    %p98 = scmp.ne.s32.totalorder %s87, %s90
    %p99 = scmp.eq.s32.totalorder %s14, 1
    %p100 = por %p98, %p99
    %p101 = scmp.ne.s32.totalorder %s90, %s91
    %p102 = scmp.eq.s32.totalorder %s14, 0
    %p103 = por %p101, %p102
    %p104 = scmp.ne.s32.totalorder %s90, %s91
    %p105 = scmp.eq.s32.totalorder %s15, 1
    %p106 = por %p104, %p105
    %p108 = scmp.ne.s32.totalorder %s91, %s107
    %p109 = scmp.eq.s32.totalorder %s15, 0
    %p110 = por %p108, %p109
    %p111 = scmp.le.s32.totalorder 1, %s9
    %p112 = scmp.lt.s32.totalorder %s9, 3
    %p113 = pnand %p111, %p112
    %p114 = pneg %p113
    // Predicated region
    $region9: #{tpu_custom_call.1} parent=5 // pred_check
      _
    $region10: #{tpu_custom_call.1} parent=5 // pred_check_branch
      %116 = sbr.rel (%p113) target = $region12
    $region11: #{tpu_custom_call.1} parent=5 // pred_region
      %s117 = ssub.s32 %s9, 1
      // Predicated region
      $region13: #{tpu_custom_call.1} parent=11 // pred_check
        %p118 = pneg %p56
      $region14: #{tpu_custom_call.1} parent=11 // pred_check_branch
        %120 = sbr.rel (%p118) target = $region16
      $region15: #{tpu_custom_call.1} parent=11 // pred_region
        _
      $region16: #{tpu_custom_call.1} parent=11 // pred_fallthru
        _
      // Predicated region
      $region17: #{tpu_custom_call.1} parent=11 // pred_check
        %p121 = pneg %p77
      $region18: #{tpu_custom_call.1} parent=11 // pred_check_branch
        %123 = sbr.rel (%p121) target = $region20
      $region19: #{tpu_custom_call.1} parent=11 // pred_region
        _
      $region20: #{tpu_custom_call.1} parent=11 // pred_fallthru
        _
    $region12: #{tpu_custom_call.1} parent=5 // pred_fallthru
      _
    %p124 = scmp.lt.s32.totalorder %s9, 2
    // Predicated region
    $region21: #{tpu_custom_call.1} parent=5 // pred_check
      %p125 = pneg %p124
    $region22: #{tpu_custom_call.1} parent=5 // pred_check_branch
      %127 = sbr.rel (%p125) target = $region24
    $region23: #{tpu_custom_call.1} parent=5 // pred_region
      // Predicated region
      $region25: #{tpu_custom_call.1} parent=23 // pred_check
        %p128 = pneg %p29
      $region26: #{tpu_custom_call.1} parent=23 // pred_check_branch
        %130 = sbr.rel (%p128) target = $region28
      $region27: #{tpu_custom_call.1} parent=23 // pred_region
        %s131 = smul.u32 12, %s9
        %p132 = scmp.lt.s32.totalorder %s131, 23
        %s133 = scalar_select %p132, %s131, 23
        %s134 = smul.addr %s133, 8
        %s135 = scalar_lea.vmem %s0, %s134
        %s136 = smul.u32 12, %s9
      $region28: #{tpu_custom_call.1} parent=23 // pred_fallthru
        _
    $region24: #{tpu_custom_call.1} parent=5 // pred_fallthru
      _
    %p137 = scmp.le.s32.totalorder 1, %s9
    %p138 = scmp.lt.s32.totalorder %s9, 3
    %p139 = pnand %p137, %p138
    %p140 = pneg %p139
    // Predicated region
    $region29: #{tpu_custom_call.1} parent=5 // pred_check
      _
    $region30: #{tpu_custom_call.1} parent=5 // pred_check_branch
      %142 = sbr.rel (%p139) target = $region32
    $region31: #{tpu_custom_call.1} parent=5 // pred_region
      %s143 = ssub.s32 %s9, 1
      %s144 = smul.u32 12, %s14
      %p145 = scmp.lt.s32.totalorder %s144, 23
      %s146 = scalar_select %p145, %s144, 23
      %s147 = smul.addr %s146, 8
      %s148 = scalar_lea.vmem %s0, %s147
      %p149 = pneg %p35
      %p150 = pneg %p32
      %p151 = pneg %p56
      %p152 = pneg %p53
      %p153 = pneg %p77
      %p154 = pneg %p74
      %p155 = pneg %p103
      %p156 = pneg %p100
      %s157 = smul.u32 4, %s14
      %p158 = scmp.lt.s32.totalorder %s157, 7
      %s159 = scalar_select %p158, %s157, 7
      %s160 = smul.addr %s159, 8
      %s161 = scalar_lea.vmem %s3, %s160
      %s162 = smul.u32 12, %s14
      %p163 = scmp.lt.s32.totalorder %s162, 23
      %s164 = scalar_select %p163, %s162, 23
      %s165 = smul.addr %s164, 8
      %s166 = scalar_lea.vmem %s0, %s165
      %s167 = smul.u32 12, %s14
      %s168 = smul.u32 4, %s14
      %p169 = scmp.lt.s32.totalorder %s168, 7
      %s170 = scalar_select %p169, %s168, 7
      %s171 = smul.addr %s170, 8
      %s172 = scalar_lea.vmem %s3, %s171
      %s173 = smul.u32 4, %s14
      %v174 = vld [vmem:[%s166] sm:$0xff]
      %v175 = vld [vmem:[%s166 + $0x8] sm:$0xff]
      %v176 = vld [vmem:[%s166 + $0x10] sm:$0xff]
      %v177 = vld [vmem:[%s166 + $0x18] sm:$0xff]
      %v178 = vld [vmem:[%s166 + $0x20] sm:$0xff]
      %v179 = vld [vmem:[%s166 + $0x28] sm:$0xff]
      %v180 = vld [vmem:[%s166 + $0x30] sm:$0xff]
      %v181 = vld [vmem:[%s166 + $0x38] sm:$0xff]
      %v182 = vld [vmem:[%s166 + $0x40] sm:$0xff]
      %v183 = vld [vmem:[%s166 + $0x48] sm:$0xff]
      %v184 = vld [vmem:[%s166 + $0x50] sm:$0xff]
      %v185 = vld [vmem:[%s166 + $0x58] sm:$0xff]
      %v186 = vld [vmem:[%s1] sm:$0xff]
      %v187 = vld [vmem:[%s1 + $0x8] sm:$0xff]
      %v188 = vld [vmem:[%s1 + $0x10] sm:$0xff]
      %v189 = vld [vmem:[%s2] sm:$0xff]
      %vm190 = vcmask 195584
      %v192 = vsel %vm190, %v174, 0
      %v195 = vsel %vm190, %v175, 0
      %v198 = vsel %vm190, %v176, 0
      %v201 = vsel %vm190, %v177, 0
      %v204 = vsel %vm190, %v178, 0
      %v207 = vsel %vm190, %v179, 0
      %v210 = vsel %vm190, %v180, 0
      %v213 = vsel %vm190, %v181, 0
      %v216 = vsel %vm190, %v182, 0
      %v219 = vsel %vm190, %v183, 0
      %v222 = vsel %vm190, %v184, 0
      %v225 = vsel %vm190, %v185, 0
      %227 = vmatpush.msra.mxu0 0.0
      %228 = vmatpush.msra.mxu0 0.0
      %229 = vmatpush.msra.mxu0 0.0
      %230 = vmatpush.msra.mxu0 0.0
      %231 = vmatpush.msra.mxu0 0.0
      %232 = vmatpush.msra.mxu0 0.0
      %233 = vmatpush.msra.mxu0 0.0
      %234 = vmatpush.msra.mxu0 0.0
      %235 = vmatpush.msra.mxu0 0.0
      %236 = vmatpush.msra.mxu0 0.0
      %237 = vmatpush.msra.mxu0 0.0
      %238 = vmatpush.msra.mxu0 0.0
      %239 = vmatpush.msra.mxu0 0.0
      %240 = vmatpush.msra.mxu0 %v188
      %241 = vmatpush.msra.mxu0 %v187
      %242 = vmatpush.msra.mxu0 %v186
      %243 = vmatmul.f32.gmra.mxu0 %v192
      %v244 = vpop.f32.mrf.mxu0
      %v245 = vadd.f32 0.0, %v244
      %246 = vmatmul.f32.gmra.mxu0 %v195
      %v247 = vpop.f32.mrf.mxu0
      %v248 = vadd.f32 0.0, %v247
      %249 = vmatmul.f32.gmra.mxu0 %v198
      %v250 = vpop.f32.mrf.mxu0
      %v251 = vadd.f32 0.0, %v250
      %252 = vmatmul.f32.gmra.mxu0 %v201
      %v253 = vpop.f32.mrf.mxu0
      %v254 = vadd.f32 0.0, %v253
      %255 = vmatmul.f32.gmra.mxu0 %v204
      %v256 = vpop.f32.mrf.mxu0
      %v257 = vadd.f32 0.0, %v256
      %258 = vmatmul.f32.gmra.mxu0 %v207
      %v259 = vpop.f32.mrf.mxu0
      %v260 = vadd.f32 0.0, %v259
      %261 = vmatmul.f32.gmra.mxu0 %v210
      %v262 = vpop.f32.mrf.mxu0
      %v263 = vadd.f32 0.0, %v262
      %264 = vmatmul.f32.gmra.mxu0 %v213
      %v265 = vpop.f32.mrf.mxu0
      %v266 = vadd.f32 0.0, %v265
      %267 = vmatmul.f32.gmra.mxu0 %v216
      %v268 = vpop.f32.mrf.mxu0
      %v269 = vadd.f32 0.0, %v268
      %270 = vmatmul.f32.gmra.mxu0 %v219
      %v271 = vpop.f32.mrf.mxu0
      %v272 = vadd.f32 0.0, %v271
      %273 = vmatmul.f32.gmra.mxu0 %v222
      %v274 = vpop.f32.mrf.mxu0
      %v275 = vadd.f32 0.0, %v274
      %276 = vmatmul.f32.gmra.mxu0 %v225
      %v277 = vpop.f32.mrf.mxu0
      %v278 = vadd.f32 0.0, %v277
      %279 = vdwg.mxu0
      %v281 = vsel %vm190, %v189, 0
      %283 = vmatpush.msra.mxu0 0.0
      %284 = vmatpush.msra.mxu0 0.0
      %285 = vmatpush.msra.mxu0 0.0
      %286 = vmatpush.msra.mxu0 0.0
      %287 = vmatpush.msra.mxu0 0.0
      %288 = vmatpush.msra.mxu0 0.0
      %289 = vmatpush.msra.mxu0 0.0
      %290 = vmatpush.msra.mxu0 0.0
      %291 = vmatpush.msra.mxu0 0.0
      %292 = vmatpush.msra.mxu0 0.0
      %293 = vmatpush.msra.mxu0 0.0
      %294 = vmatpush.msra.mxu0 0.0
      %295 = vmatpush.msra.mxu0 0.0
      %296 = vmatpush.msra.mxu0 %v251
      %297 = vmatpush.msra.mxu0 %v248
      %298 = vmatpush.msra.mxu0 %v245
      %299 = vmatmul.f32.gmra.mxu0 %v281
      %v300 = vpop.f32.mrf.mxu0
      %v301 = vadd.f32 0.0, %v300
      %302 = vdwg.mxu0
      %vm303 = vcmask 64512
      %304 = vst.msk [vmem:[%s172] sm:$0xff] %vm303, %v301
      %305 = vmatpush.msra.mxu0 0.0
      %306 = vmatpush.msra.mxu0 0.0
      %307 = vmatpush.msra.mxu0 0.0
      %308 = vmatpush.msra.mxu0 0.0
      %309 = vmatpush.msra.mxu0 0.0
      %310 = vmatpush.msra.mxu0 0.0
      %311 = vmatpush.msra.mxu0 0.0
      %312 = vmatpush.msra.mxu0 0.0
      %313 = vmatpush.msra.mxu0 0.0
      %314 = vmatpush.msra.mxu0 0.0
      %315 = vmatpush.msra.mxu0 0.0
      %316 = vmatpush.msra.mxu0 0.0
      %317 = vmatpush.msra.mxu0 0.0
      %318 = vmatpush.msra.mxu0 %v260
      %319 = vmatpush.msra.mxu0 %v257
      %320 = vmatpush.msra.mxu0 %v254
      %321 = vmatmul.f32.gmra.mxu0 %v281
      %v322 = vpop.f32.mrf.mxu0
      %v323 = vadd.f32 0.0, %v322
      %324 = vdwg.mxu0
      %325 = vst.msk [vmem:[%s172 + $0x8] sm:$0xff] %vm303, %v323
      %326 = vmatpush.msra.mxu0 0.0
      %327 = vmatpush.msra.mxu0 0.0
      %328 = vmatpush.msra.mxu0 0.0
      %329 = vmatpush.msra.mxu0 0.0
      %330 = vmatpush.msra.mxu0 0.0
      %331 = vmatpush.msra.mxu0 0.0
      %332 = vmatpush.msra.mxu0 0.0
      %333 = vmatpush.msra.mxu0 0.0
      %334 = vmatpush.msra.mxu0 0.0
      %335 = vmatpush.msra.mxu0 0.0
      %336 = vmatpush.msra.mxu0 0.0
      %337 = vmatpush.msra.mxu0 0.0
      %338 = vmatpush.msra.mxu0 0.0
      %339 = vmatpush.msra.mxu0 %v269
      %340 = vmatpush.msra.mxu0 %v266
      %341 = vmatpush.msra.mxu0 %v263
      %342 = vmatmul.f32.gmra.mxu0 %v281
      %v343 = vpop.f32.mrf.mxu0
      %v344 = vadd.f32 0.0, %v343
      %345 = vdwg.mxu0
      %346 = vst.msk [vmem:[%s172 + $0x10] sm:$0xff] %vm303, %v344
      %347 = vmatpush.msra.mxu0 0.0
      %348 = vmatpush.msra.mxu0 0.0
      %349 = vmatpush.msra.mxu0 0.0
      %350 = vmatpush.msra.mxu0 0.0
      %351 = vmatpush.msra.mxu0 0.0
      %352 = vmatpush.msra.mxu0 0.0
      %353 = vmatpush.msra.mxu0 0.0
      %354 = vmatpush.msra.mxu0 0.0
      %355 = vmatpush.msra.mxu0 0.0
      %356 = vmatpush.msra.mxu0 0.0
      %357 = vmatpush.msra.mxu0 0.0
      %358 = vmatpush.msra.mxu0 0.0
      %359 = vmatpush.msra.mxu0 0.0
      %360 = vmatpush.msra.mxu0 %v278
      %361 = vmatpush.msra.mxu0 %v275
      %362 = vmatpush.msra.mxu0 %v272
      %363 = vmatmul.f32.gmra.mxu0 %v281
      %v364 = vpop.f32.mrf.mxu0
      %v365 = vadd.f32 0.0, %v364
      %366 = vdwg.mxu0
      %367 = vst.msk [vmem:[%s172 + $0x18] sm:$0xff] %vm303, %v365
      %s368 = smul.u32 4, %s14
      %p369 = scmp.lt.s32.totalorder %s368, 7
      %s370 = scalar_select %p369, %s368, 7
      %s371 = smul.addr %s370, 8
      %s372 = scalar_lea.vmem %s3, %s371
      // Predicated region
      $region33: #{tpu_custom_call.1} parent=31 // pred_check
        %p373 = pneg %p100
      $region34: #{tpu_custom_call.1} parent=31 // pred_check_branch
        %375 = sbr.rel (%p373) target = $region36
      $region35: #{tpu_custom_call.1} parent=31 // pred_region
        %s376 = smul.u32 4, %s14
      $region36: #{tpu_custom_call.1} parent=31 // pred_fallthru
        _
    $region32: #{tpu_custom_call.1} parent=5 // pred_fallthru
      _
    %p377 = scmp.le.s32.totalorder 2, %s9
    // Predicated region
    $region37: #{tpu_custom_call.1} parent=5 // pred_check
      %p378 = pneg %p377
    $region38: #{tpu_custom_call.1} parent=5 // pred_check_branch
      %380 = sbr.rel (%p378) target = $region40
    $region39: #{tpu_custom_call.1} parent=5 // pred_region
      %s381 = ssub.s32 %s9, 2
      // Predicated region
      $region41: #{tpu_custom_call.1} parent=39 // pred_check
        %p382 = pneg %p106
      $region42: #{tpu_custom_call.1} parent=39 // pred_check_branch
        %384 = sbr.rel (%p382) target = $region44
      $region43: #{tpu_custom_call.1} parent=39 // pred_region
        %s385 = smul.u32 4, %s15
        %p386 = scmp.lt.s32.totalorder %s385, 7
        %s387 = scalar_select %p386, %s385, 7
        %s388 = smul.addr %s387, 8
        %s389 = scalar_lea.vmem %s3, %s388
      $region44: #{tpu_custom_call.1} parent=39 // pred_fallthru
        _
    $region40: #{tpu_custom_call.1} parent=5 // pred_fallthru
      _
  $region6: #{tpu_custom_call.1} parent=0 // loop_footer
    %s13 = sadd.s32 1, %s9
  $region7: #{tpu_custom_call.1} parent=0 // loop_footer_branch
    %8 = sbr.rel target = $region3
  $region8: #{tpu_custom_call.1} parent=0 // loop_exit
    _

</llo_original>
